<compile_context>
chip_gen: v5e
topology: v5e:2x2
jax: 0.10.0
libtpu: 0.0.40
codegen_flags: <defaults>
</compile_context>

<pallas_src>
import functools

import jax
import jax.numpy as jnp
from jax.experimental import pallas as pl
from jax.experimental.pallas import tpu as pltpu

T_OUT = 100  # default T of PRPredictor
IN_DIM = 2
HIDDEN = (64, 128, 128, 128)


def _round_up(x, m):
    return ((x + m - 1) // m) * m


def _mlp_kernel(x_ref,
                w1_ref, b1_ref,
                w2_ref, b2_ref,
                w3_ref, b3_ref,
                w4_ref, b4_ref,
                w5_ref, b5_ref,
                o_ref, *, use_bf16=False):
    """Whole 5-layer forward pass for one batch tile, fused in VMEM."""
    x = x_ref[...].astype(jnp.float32)               # (tb, 2)
    w1 = w1_ref[...]                                 # (2, 64)

    # Layer 1 (K=2): two broadcast multiply-adds on the VPU instead of an MXU pass.
    h = (x[:, 0:1] * w1[0:1, :] + x[:, 1:2] * w1[1:2, :]) + b1_ref[...]
    h = jnp.maximum(h, 0.0)

    mxu_dt = jnp.bfloat16 if use_bf16 else jnp.float32

    def dense(h, w_ref, b_ref):
        return jnp.dot(h.astype(mxu_dt), w_ref[...].astype(mxu_dt),
                       preferred_element_type=jnp.float32) + b_ref[...]

    h = jnp.maximum(dense(h, w2_ref, b2_ref), 0.0)
    h = jnp.maximum(dense(h, w3_ref, b3_ref), 0.0)
    h = jnp.maximum(dense(h, w4_ref, b4_ref), 0.0)
    out = dense(h, w5_ref, b5_ref)                   # (tb, T) — no final ReLU

    o_ref[...] = out.astype(o_ref.dtype)


def _pick_tile_b(B):
    """Batch tile selection.
    - B <= 128: single step (nothing to split).
    - 128 < B <= 256: 2 steps so both v7x TensorCores get work.
    - mid/large B: ~4 steps in multiples of 256 (MXU-friendly), capped at 2048
      so per-step overhead (~0.35us) stays well below per-step compute."""
    if B <= 128:
        return B
    if B <= 256:
        return _round_up(pl.cdiv(B, 2), 8)
    if B <= 4096:
        return min(B, max(256, _round_up(pl.cdiv(B, 4), 256)))
    return 2048


@functools.partial(jax.jit, static_argnames=("tile_b", "use_bf16"))
def pr_predictor_forward(x, params, tile_b=None, use_bf16=False):
    """x: (B, 2) float32.  params: flat tuple (w1, b1, ..., w5, b5);
    weights are (in, out), biases (1, out).  Returns (B, T) float32."""
    B, in_dim = x.shape
    params = tuple(params)
    t_out = params[-1].shape[-1]
    if tile_b is None:
        tile_b = _pick_tile_b(B)

    grid = (pl.cdiv(B, tile_b),)

    # x / out are tiled over batch; all params (~215 KB) are full-block with a
    # constant index_map (resident in VMEM across grid steps) and single-buffered
    # since they are never re-fetched.
    in_specs = [pl.BlockSpec((tile_b, in_dim), lambda i: (i, 0))]
    for p in params:
        in_specs.append(
            pl.BlockSpec(p.shape, lambda i: (0, 0), pipeline_mode=pl.Buffered(1)))

    dims = (IN_DIM,) + HIDDEN + (t_out,)
    flops_per_row = 2 * sum(a * b for a, b in zip(dims[:-1], dims[1:]))
    param_bytes = sum(int(p.size) * p.dtype.itemsize for p in params)
    cost = pl.CostEstimate(
        flops=B * flops_per_row,
        transcendentals=0,
        bytes_accessed=B * (in_dim + t_out) * 4 + param_bytes,
    )

    kernel = functools.partial(_mlp_kernel, use_bf16=use_bf16)

    out = pl.pallas_call(
        kernel,
        out_shape=jax.ShapeDtypeStruct((B, t_out), jnp.float32),
        grid_spec=pltpu.PrefetchScalarGridSpec(
            num_scalar_prefetch=0,
            grid=grid,
            in_specs=in_specs,
            out_specs=pl.BlockSpec((tile_b, t_out), lambda i: (i, 0)),
        ),
        compiler_params=pltpu.CompilerParams(
            dimension_semantics=("parallel",)),
        cost_estimate=cost,
    )(x, *params)
    return out


def init_params(key, t_out=T_OUT):
    """Deterministic init matching nn.Linear's U(-1/sqrt(fan_in), 1/sqrt(fan_in))."""
    dims = (IN_DIM,) + HIDDEN + (t_out,)
    params = []
    for li in range(len(dims) - 1):
        fan_in, fan_out = dims[li], dims[li + 1]
        key, kw, kb = jax.random.split(key, 3)
        bound = 1.0 / jnp.sqrt(jnp.float32(fan_in))
        w = jax.random.uniform(kw, (fan_in, fan_out), jnp.float32, -bound, bound)
        b = jax.random.uniform(kb, (1, fan_out), jnp.float32, -bound, bound)
        params += [w, b]
    return tuple(params)


def reference_forward(x, params):
    h = x
    n_layers = len(params) // 2
    for li in range(n_layers):
        w, b = params[2 * li], params[2 * li + 1]
        h = jnp.dot(h, w, precision=jax.lax.Precision.HIGHEST) + b
        if li != n_layers - 1:
            h = jnp.maximum(h, 0.0)
    return h


if __name__ == "__main__":
    key = jax.random.PRNGKey(0)
    kx, kp = jax.random.split(key)

    params = init_params(kp, t_out=T_OUT)

    # Small primary check (single grid step, unmasked path except the 100-wide store).
    B = 8
    x = jax.random.normal(kx, (B, IN_DIM), jnp.float32)
    out = jax.block_until_ready(pr_predictor_forward(x, params))
    ref = reference_forward(x, params)
    assert out.shape == (B, T_OUT), out.shape
    assert jnp.allclose(out, ref, atol=1e-4, rtol=1e-4), \
        float(jnp.max(jnp.abs(out - ref)))

    # Multi-step grid with a partial edge block (B=384 -> tile_b=256, grid=2).
    B2 = 384
    x2 = jax.random.normal(jax.random.PRNGKey(1), (B2, IN_DIM), jnp.float32)
    out2 = jax.block_until_ready(pr_predictor_forward(x2, params))
    ref2 = reference_forward(x2, params)
    assert out2.shape == (B2, T_OUT), out2.shape
    assert jnp.allclose(out2, ref2, atol=1e-4, rtol=1e-4), \
        float(jnp.max(jnp.abs(out2 - ref2)))

    # Opt-in bf16 MXU fast path (f32 accumulation) — looser tolerance by design.
    out3 = jax.block_until_ready(pr_predictor_forward(x, params, use_bf16=True))
    assert out3.shape == (B, T_OUT), out3.shape
    assert jnp.allclose(out3, ref, atol=5e-2, rtol=5e-2), \
        float(jnp.max(jnp.abs(out3 - ref)))

    print("KERNEL_OK")
</pallas_src>

<mosaic_0001>
module attributes {stable_mosaic.version = 11 : i64} {
  func.func @_mlp_kernel(%arg0: i32, %arg1: memref<8x2xf32, #tpu.memory_space<vmem>>, %arg2: memref<2x64xf32, #tpu.memory_space<vmem>>, %arg3: memref<1x64xf32, #tpu.memory_space<vmem>>, %arg4: memref<64x128xf32, #tpu.memory_space<vmem>>, %arg5: memref<1x128xf32, #tpu.memory_space<vmem>>, %arg6: memref<128x128xf32, #tpu.memory_space<vmem>>, %arg7: memref<1x128xf32, #tpu.memory_space<vmem>>, %arg8: memref<128x128xf32, #tpu.memory_space<vmem>>, %arg9: memref<1x128xf32, #tpu.memory_space<vmem>>, %arg10: memref<128x100xf32, #tpu.memory_space<vmem>>, %arg11: memref<1x100xf32, #tpu.memory_space<vmem>>, %arg12: memref<8x100xf32, #tpu.memory_space<vmem>>) attributes {dimension_semantics = [#tpu.dimension_semantics<parallel>], iteration_bounds = array<i64: 1>, scalar_prefetch = 0 : i64, scratch_operands = 0 : i64, tpu.core_type = #tpu.core_type<tc>, window_params = [{transform_indices = @transform_0, window_bounds = array<i64: 8, 2>}, {pipeline_mode = #tpu.pipeline_mode<synchronous>, transform_indices = @transform_1, window_bounds = array<i64: 2, 64>}, {pipeline_mode = #tpu.pipeline_mode<synchronous>, transform_indices = @transform_2, window_bounds = array<i64: 1, 64>}, {pipeline_mode = #tpu.pipeline_mode<synchronous>, transform_indices = @transform_3, window_bounds = array<i64: 64, 128>}, {pipeline_mode = #tpu.pipeline_mode<synchronous>, transform_indices = @transform_4, window_bounds = array<i64: 1, 128>}, {pipeline_mode = #tpu.pipeline_mode<synchronous>, transform_indices = @transform_5, window_bounds = array<i64: 128, 128>}, {pipeline_mode = #tpu.pipeline_mode<synchronous>, transform_indices = @transform_6, window_bounds = array<i64: 1, 128>}, {pipeline_mode = #tpu.pipeline_mode<synchronous>, transform_indices = @transform_7, window_bounds = array<i64: 128, 128>}, {pipeline_mode = #tpu.pipeline_mode<synchronous>, transform_indices = @transform_8, window_bounds = array<i64: 1, 128>}, {pipeline_mode = #tpu.pipeline_mode<synchronous>, transform_indices = @transform_9, window_bounds = array<i64: 128, 100>}, {pipeline_mode = #tpu.pipeline_mode<synchronous>, transform_indices = @transform_10, window_bounds = array<i64: 1, 100>}, {transform_indices = @transform_11, window_bounds = array<i64: 8, 100>}]} {
    %c0 = arith.constant 0 : index
    %c0_0 = arith.constant 0 : index
    %0 = vector.load %arg1[%c0, %c0_0] : memref<8x2xf32, #tpu.memory_space<vmem>>, vector<8x2xf32>
    %c0_1 = arith.constant 0 : index
    %c0_2 = arith.constant 0 : index
    %1 = vector.load %arg2[%c0_1, %c0_2] : memref<2x64xf32, #tpu.memory_space<vmem>>, vector<2x64xf32>
    %2 = vector.extract_strided_slice %0 {offsets = [0, 0], sizes = [8, 1], strides = [1, 1]} : vector<8x2xf32> to vector<8x1xf32>
    %3 = vector.extract_strided_slice %1 {offsets = [0, 0], sizes = [1, 64], strides = [1, 1]} : vector<2x64xf32> to vector<1x64xf32>
    %4 = vector.broadcast %2 : vector<8x1xf32> to vector<8x64xf32>
    %5 = vector.broadcast %3 : vector<1x64xf32> to vector<8x64xf32>
    %6 = arith.mulf %4, %5 : vector<8x64xf32>
    %7 = vector.extract_strided_slice %0 {offsets = [0, 1], sizes = [8, 1], strides = [1, 1]} : vector<8x2xf32> to vector<8x1xf32>
    %8 = vector.extract_strided_slice %1 {offsets = [1, 0], sizes = [1, 64], strides = [1, 1]} : vector<2x64xf32> to vector<1x64xf32>
    %9 = vector.broadcast %7 : vector<8x1xf32> to vector<8x64xf32>
    %10 = vector.broadcast %8 : vector<1x64xf32> to vector<8x64xf32>
    %11 = arith.mulf %9, %10 : vector<8x64xf32>
    %12 = arith.addf %6, %11 : vector<8x64xf32>
    %c0_3 = arith.constant 0 : index
    %c0_4 = arith.constant 0 : index
    %13 = vector.load %arg3[%c0_3, %c0_4] : memref<1x64xf32, #tpu.memory_space<vmem>>, vector<1x64xf32>
    %14 = vector.broadcast %13 : vector<1x64xf32> to vector<8x64xf32>
    %15 = arith.addf %12, %14 : vector<8x64xf32>
    %cst = arith.constant 0.000000e+00 : f32
    %16 = vector.broadcast %cst : f32 to vector<8x64xf32>
    %17 = arith.maximumf %15, %16 : vector<8x64xf32>
    %c0_5 = arith.constant 0 : index
    %c0_6 = arith.constant 0 : index
    %18 = vector.load %arg4[%c0_5, %c0_6] : memref<64x128xf32, #tpu.memory_space<vmem>>, vector<64x128xf32>
    %cst_7 = arith.constant dense<0.000000e+00> : vector<8x128xf32>
    %19 = tpu.matmul %17, %18, %cst_7 {dimension_numbers = #tpu.dot_dimension_numbers<[1], [0], [0], [1], [0, 0, 1, 1], [], []>} : vector<8x64xf32>, vector<64x128xf32>, vector<8x128xf32> -> vector<8x128xf32>
    %c0_8 = arith.constant 0 : index
    %c0_9 = arith.constant 0 : index
    %20 = vector.load %arg5[%c0_8, %c0_9] : memref<1x128xf32, #tpu.memory_space<vmem>>, vector<1x128xf32>
    %21 = vector.broadcast %20 : vector<1x128xf32> to vector<8x128xf32>
    %22 = arith.addf %19, %21 : vector<8x128xf32>
    %cst_10 = arith.constant 0.000000e+00 : f32
    %23 = vector.broadcast %cst_10 : f32 to vector<8x128xf32>
    %24 = arith.maximumf %22, %23 : vector<8x128xf32>
    %c0_11 = arith.constant 0 : index
    %c0_12 = arith.constant 0 : index
    %25 = vector.load %arg6[%c0_11, %c0_12] : memref<128x128xf32, #tpu.memory_space<vmem>>, vector<128x128xf32>
    %cst_13 = arith.constant dense<0.000000e+00> : vector<8x128xf32>
    %26 = tpu.matmul %24, %25, %cst_13 {dimension_numbers = #tpu.dot_dimension_numbers<[1], [0], [0], [1], [0, 0, 1, 1], [], []>} : vector<8x128xf32>, vector<128x128xf32>, vector<8x128xf32> -> vector<8x128xf32>
    %c0_14 = arith.constant 0 : index
    %c0_15 = arith.constant 0 : index
    %27 = vector.load %arg7[%c0_14, %c0_15] : memref<1x128xf32, #tpu.memory_space<vmem>>, vector<1x128xf32>
    %28 = vector.broadcast %27 : vector<1x128xf32> to vector<8x128xf32>
    %29 = arith.addf %26, %28 : vector<8x128xf32>
    %cst_16 = arith.constant 0.000000e+00 : f32
    %30 = vector.broadcast %cst_16 : f32 to vector<8x128xf32>
    %31 = arith.maximumf %29, %30 : vector<8x128xf32>
    %c0_17 = arith.constant 0 : index
    %c0_18 = arith.constant 0 : index
    %32 = vector.load %arg8[%c0_17, %c0_18] : memref<128x128xf32, #tpu.memory_space<vmem>>, vector<128x128xf32>
    %cst_19 = arith.constant dense<0.000000e+00> : vector<8x128xf32>
    %33 = tpu.matmul %31, %32, %cst_19 {dimension_numbers = #tpu.dot_dimension_numbers<[1], [0], [0], [1], [0, 0, 1, 1], [], []>} : vector<8x128xf32>, vector<128x128xf32>, vector<8x128xf32> -> vector<8x128xf32>
    %c0_20 = arith.constant 0 : index
    %c0_21 = arith.constant 0 : index
    %34 = vector.load %arg9[%c0_20, %c0_21] : memref<1x128xf32, #tpu.memory_space<vmem>>, vector<1x128xf32>
    %35 = vector.broadcast %34 : vector<1x128xf32> to vector<8x128xf32>
    %36 = arith.addf %33, %35 : vector<8x128xf32>
    %cst_22 = arith.constant 0.000000e+00 : f32
    %37 = vector.broadcast %cst_22 : f32 to vector<8x128xf32>
    %38 = arith.maximumf %36, %37 : vector<8x128xf32>
    %c0_23 = arith.constant 0 : index
    %c0_24 = arith.constant 0 : index
    %39 = vector.load %arg10[%c0_23, %c0_24] : memref<128x100xf32, #tpu.memory_space<vmem>>, vector<128x100xf32>
    %cst_25 = arith.constant dense<0.000000e+00> : vector<8x100xf32>
    %40 = tpu.matmul %38, %39, %cst_25 {dimension_numbers = #tpu.dot_dimension_numbers<[1], [0], [0], [1], [0, 0, 1, 1], [], []>} : vector<8x128xf32>, vector<128x100xf32>, vector<8x100xf32> -> vector<8x100xf32>
    %c0_26 = arith.constant 0 : index
    %c0_27 = arith.constant 0 : index
    %41 = vector.load %arg11[%c0_26, %c0_27] : memref<1x100xf32, #tpu.memory_space<vmem>>, vector<1x100xf32>
    %42 = vector.broadcast %41 : vector<1x100xf32> to vector<8x100xf32>
    %43 = arith.addf %40, %42 : vector<8x100xf32>
    %c0_28 = arith.constant 0 : index
    %c0_29 = arith.constant 0 : index
    %44 = vector.load %arg12[%c0_28, %c0_29] : memref<8x100xf32, #tpu.memory_space<vmem>>, vector<8x100xf32>
    tpu.vector_store %arg12[%c0_28, %c0_29], %43 {strides = array<i32>} : memref<8x100xf32, #tpu.memory_space<vmem>>, vector<8x100xf32>,
    return
  }
  func.func @transform_0(%arg0: i32) -> (i32, i32) {
    %c0_i32 = arith.constant 0 : i32
    %c0_i32_0 = arith.constant 0 : i32
    return %arg0, %c0_i32 : i32, i32
  }
  func.func @transform_1(%arg0: i32) -> (i32, i32) {
    %c0_i32 = arith.constant 0 : i32
    %c0_i32_0 = arith.constant 0 : i32
    %c0_i32_1 = arith.constant 0 : i32
    return %c0_i32, %c0_i32_0 : i32, i32
  }
  func.func @transform_2(%arg0: i32) -> (i32, i32) {
    %c0_i32 = arith.constant 0 : i32
    %c0_i32_0 = arith.constant 0 : i32
    %c0_i32_1 = arith.constant 0 : i32
    return %c0_i32, %c0_i32_0 : i32, i32
  }
  func.func @transform_3(%arg0: i32) -> (i32, i32) {
    %c0_i32 = arith.constant 0 : i32
    %c0_i32_0 = arith.constant 0 : i32
    %c0_i32_1 = arith.constant 0 : i32
    return %c0_i32, %c0_i32_0 : i32, i32
  }
  func.func @transform_4(%arg0: i32) -> (i32, i32) {
    %c0_i32 = arith.constant 0 : i32
    %c0_i32_0 = arith.constant 0 : i32
    %c0_i32_1 = arith.constant 0 : i32
    return %c0_i32, %c0_i32_0 : i32, i32
  }
  func.func @transform_5(%arg0: i32) -> (i32, i32) {
    %c0_i32 = arith.constant 0 : i32
    %c0_i32_0 = arith.constant 0 : i32
    %c0_i32_1 = arith.constant 0 : i32
    return %c0_i32, %c0_i32_0 : i32, i32
  }
  func.func @transform_6(%arg0: i32) -> (i32, i32) {
    %c0_i32 = arith.constant 0 : i32
    %c0_i32_0 = arith.constant 0 : i32
    %c0_i32_1 = arith.constant 0 : i32
    return %c0_i32, %c0_i32_0 : i32, i32
  }
  func.func @transform_7(%arg0: i32) -> (i32, i32) {
    %c0_i32 = arith.constant 0 : i32
    %c0_i32_0 = arith.constant 0 : i32
    %c0_i32_1 = arith.constant 0 : i32
    return %c0_i32, %c0_i32_0 : i32, i32
  }
  func.func @transform_8(%arg0: i32) -> (i32, i32) {
    %c0_i32 = arith.constant 0 : i32
    %c0_i32_0 = arith.constant 0 : i32
    %c0_i32_1 = arith.constant 0 : i32
    return %c0_i32, %c0_i32_0 : i32, i32
  }
  func.func @transform_9(%arg0: i32) -> (i32, i32) {
    %c0_i32 = arith.constant 0 : i32
    %c0_i32_0 = arith.constant 0 : i32
    %c0_i32_1 = arith.constant 0 : i32
    return %c0_i32, %c0_i32_0 : i32, i32
  }
  func.func @transform_10(%arg0: i32) -> (i32, i32) {
    %c0_i32 = arith.constant 0 : i32
    %c0_i32_0 = arith.constant 0 : i32
    %c0_i32_1 = arith.constant 0 : i32
    return %c0_i32, %c0_i32_0 : i32, i32
  }
  func.func @transform_11(%arg0: i32) -> (i32, i32) {
    %c0_i32 = arith.constant 0 : i32
    %c0_i32_0 = arith.constant 0 : i32
    return %arg0, %c0_i32 : i32, i32
  }
}

</mosaic_0001>

<llo_original>
// kernel: pr_predictor_forward.1
$region0: #{pr_predictor_forward.1}
  #allocation0 [shape = 'u32[]', space=smem, size = 0x4, offset = 0x4, fixed_abs, tag = 'smem constant byte address 0x4 - core index']
  #allocation1 [shape = 'u32[72,128]{1,0:T(1,128)}', space=vmem, size = 0x9000, scoped, tag = 'internal scratch']
  %s0 = inlined_call_operand.vmem [shape: f32[8,2], index: 0, kind: input, shape index: {}]
  %s1 = inlined_call_operand.vmem [shape: f32[2,64], index: 1, kind: input, shape index: {}]
  %s2 = inlined_call_operand.vmem [shape: f32[1,64], index: 2, kind: input, shape index: {}]
  %s3 = inlined_call_operand.vmem [shape: f32[64,128], index: 3, kind: input, shape index: {}]
  %s4 = inlined_call_operand.vmem [shape: f32[1,128], index: 4, kind: input, shape index: {}]
  %s5 = inlined_call_operand.vmem [shape: f32[128,128], index: 5, kind: input, shape index: {}]
  %s6 = inlined_call_operand.vmem [shape: f32[1,128], index: 6, kind: input, shape index: {}]
  %s7 = inlined_call_operand.hbm [shape: f32[128,128], index: 7, kind: input, shape index: {}]
  %s8 = inlined_call_operand.vmem [shape: f32[1,128], index: 8, kind: input, shape index: {}]
  %s9 = inlined_call_operand.vmem [shape: f32[128,100], index: 9, kind: input, shape index: {}]
  %s10 = inlined_call_operand.vmem [shape: f32[1,100], index: 10, kind: input, shape index: {}]
  %s11 = inlined_call_operand.hbm [shape: f32[8,100], index: 11, kind: output, shape index: {}]
  %s12 = sld [smem:[#allocation0]]
  $region58: #{pr_predictor_forward.1} parent=0
    _
  %s14 = ssub.s32 1, %s12
  %s15 = scalar_select 0, %s14, %s12
  $region1: #{pr_predictor_forward.1} parent=0
    #allocation2 [shape = 'u8[65536]{0}', space=vmem, size = 0x10000, scoped, tag = 'input window, operand 7, single buffered']
    #allocation3 [shape = 's32[1]{0}', space=sflag, size = 0x4, scoped, tag = 'scoped memory for pr_predictor_forward.1']
    #allocation4 [shape = 's32[1]{0}', space=sflag, size = 0x4, scoped, tag = 'scoped memory for pr_predictor_forward.1']
    #allocation5 [shape = 'u8[4096]{0}', space=vmem, size = 0x1000, scoped, tag = 'output window, operand 0, single buffered']
    %16 = vsyncpa [#allocation3], 0
    %17 = vsyncpa [#allocation4], 0
    // Predicated region
    $region2: #{pr_predictor_forward.1} parent=1 // pred_check
      _
    $region3: #{pr_predictor_forward.1} parent=1 // pred_check_branch
      %19 = sbr.rel (0) target = $region5
    $region4: #{pr_predictor_forward.1} parent=1 // pred_region
      _
    $region5: #{pr_predictor_forward.1} parent=1 // pred_fallthru
      _
    // Predicated region
    $region6: #{pr_predictor_forward.1} parent=1 // pred_check
      _
    $region7: #{pr_predictor_forward.1} parent=1 // pred_check_branch
      %21 = sbr.rel (0) target = $region9
    $region8: #{pr_predictor_forward.1} parent=1 // pred_region
      _
    $region9: #{pr_predictor_forward.1} parent=1 // pred_fallthru
      _
    // Predicated region
    $region10: #{pr_predictor_forward.1} parent=1 // pred_check
      _
    $region11: #{pr_predictor_forward.1} parent=1 // pred_check_branch
      %23 = sbr.rel (0) target = $region13
    $region12: #{pr_predictor_forward.1} parent=1 // pred_region
      _
    $region13: #{pr_predictor_forward.1} parent=1 // pred_fallthru
      _
    // Predicated region
    $region14: #{pr_predictor_forward.1} parent=1 // pred_check
      _
    $region15: #{pr_predictor_forward.1} parent=1 // pred_check_branch
      %25 = sbr.rel (0) target = $region17
    $region16: #{pr_predictor_forward.1} parent=1 // pred_region
      _
    $region17: #{pr_predictor_forward.1} parent=1 // pred_fallthru
      _
    // Predicated region
    $region18: #{pr_predictor_forward.1} parent=1 // pred_check
      _
    $region19: #{pr_predictor_forward.1} parent=1 // pred_check_branch
      %27 = sbr.rel (0) target = $region21
    $region20: #{pr_predictor_forward.1} parent=1 // pred_region
      _
    $region21: #{pr_predictor_forward.1} parent=1 // pred_fallthru
      _
    // Predicated region
    $region22: #{pr_predictor_forward.1} parent=1 // pred_check
      _
    $region23: #{pr_predictor_forward.1} parent=1 // pred_check_branch
      %29 = sbr.rel (0) target = $region25
    $region24: #{pr_predictor_forward.1} parent=1 // pred_region
      _
    $region25: #{pr_predictor_forward.1} parent=1 // pred_fallthru
      _
    // Predicated region
    $region26: #{pr_predictor_forward.1} parent=1 // pred_check
      _
    $region27: #{pr_predictor_forward.1} parent=1 // pred_check_branch
      %31 = sbr.rel (0) target = $region29
    $region28: #{pr_predictor_forward.1} parent=1 // pred_region
      _
    $region29: #{pr_predictor_forward.1} parent=1 // pred_fallthru
      _
    // Predicated region
    $region30: #{pr_predictor_forward.1} parent=1 // pred_check
      _
    $region31: #{pr_predictor_forward.1} parent=1 // pred_check_branch
      %33 = sbr.rel (0) target = $region33
    $region32: #{pr_predictor_forward.1} parent=1 // pred_region
      %35 = vsyncadd [#allocation3], 0
      %s36 = sshll.u32 %s7, 4
      %s37 = int_to_ptr.hbm [resolvable:$true] %s36
      %s38 = sshll.u32 [#allocation2], 4
      %s39 = int_to_ptr.vmem [resolvable:$true] %s38
      %44 = dma.hbm_to_vmem [thread:$0]  %s37, 2048, %s39, [#allocation3], 128, 128, 8
    $region33: #{pr_predictor_forward.1} parent=1 // pred_fallthru
      _
    // Predicated region
    $region34: #{pr_predictor_forward.1} parent=1 // pred_check
      _
    $region35: #{pr_predictor_forward.1} parent=1 // pred_check_branch
      %46 = sbr.rel (0) target = $region37
    $region36: #{pr_predictor_forward.1} parent=1 // pred_region
      _
    $region37: #{pr_predictor_forward.1} parent=1 // pred_fallthru
      _
    // Predicated region
    $region38: #{pr_predictor_forward.1} parent=1 // pred_check
      _
    $region39: #{pr_predictor_forward.1} parent=1 // pred_check_branch
      %48 = sbr.rel (0) target = $region41
    $region40: #{pr_predictor_forward.1} parent=1 // pred_region
      _
    $region41: #{pr_predictor_forward.1} parent=1 // pred_fallthru
      _
    // Predicated region
    $region42: #{pr_predictor_forward.1} parent=1 // pred_check
      _
    $region43: #{pr_predictor_forward.1} parent=1 // pred_check_branch
      %50 = sbr.rel (0) target = $region45
    $region44: #{pr_predictor_forward.1} parent=1 // pred_region
      _
    $region45: #{pr_predictor_forward.1} parent=1 // pred_fallthru
      _
    // Predicated region
    $region46: #{pr_predictor_forward.1} parent=1 // pred_check
      _
    $region47: #{pr_predictor_forward.1} parent=1 // pred_check_branch
      %52 = sbr.rel (0) target = $region49
    $region48: #{pr_predictor_forward.1} parent=1 // pred_region
      %54 = dma.done [#allocation3], 2048
    $region49: #{pr_predictor_forward.1} parent=1 // pred_fallthru
      _
    %v55 = vld [vmem:[%s0] sm:$0xff]
    %v56 = vld [vmem:[%s1] sm:$0x3]
    %58 = vset.pattern.permute.xlu0 0
    %59 = vperm.xlu0 %58, %v55
    %v60 = vpop.permute.xlu0 %59
    %v62 = vperm.slane %v56, 0
    %v63 = vmul.f32 %v60, %v62
    %64 = vset.pattern.permute.xlu0 1
    %65 = vperm.xlu0 %64, %v55
    %v66 = vpop.permute.xlu0 %65
    %v68 = vperm.slane %v56, 1
    %v69 = vmul.f32 %v66, %v68
    %v70 = vadd.f32 %v63, %v69
    %v71 = vld [vmem:[%s2] sm:$0x1]
    %v73 = vperm.slane %v71, 0
    %v75 = vadd.f32 %v70, %v73
    %v76 = vmax.f32 %v75, 0.0
    %v77 = vld [vmem:[%s3] sm:$0xff]
    %v78 = vld [vmem:[%s3 + $0x8] sm:$0xff]
    %v79 = vld [vmem:[%s3 + $0x10] sm:$0xff]
    %v80 = vld [vmem:[%s3 + $0x18] sm:$0xff]
    %v81 = vld [vmem:[%s3 + $0x20] sm:$0xff]
    %v82 = vld [vmem:[%s3 + $0x28] sm:$0xff]
    %v83 = vld [vmem:[%s3 + $0x30] sm:$0xff]
    %v84 = vld [vmem:[%s3 + $0x38] sm:$0xff]
    %v85 = vld [vmem:[%s4] sm:$0x1]
    %v87 = vperm.slane %v85, 0
    %vm89 = vcmask 523264
    %v91 = vsel %vm89, %v76, 0
    %93 = vmatpush.msra.mxu0 0.0
    %94 = vmatpush.msra.mxu0 0.0
    %95 = vmatpush.msra.mxu0 0.0
    %96 = vmatpush.msra.mxu0 0.0
    %97 = vmatpush.msra.mxu0 0.0
    %98 = vmatpush.msra.mxu0 0.0
    %99 = vmatpush.msra.mxu0 0.0
    %100 = vmatpush.msra.mxu0 0.0
    %101 = vmatpush.msra.mxu0 %v84
    %102 = vmatpush.msra.mxu0 %v83
    %103 = vmatpush.msra.mxu0 %v82
    %104 = vmatpush.msra.mxu0 %v81
    %105 = vmatpush.msra.mxu0 %v80
    %106 = vmatpush.msra.mxu0 %v79
    %107 = vmatpush.msra.mxu0 %v78
    %108 = vmatpush.msra.mxu0 %v77
    %109 = vmatmul.f32.gmra.mxu0 %v91
    %v110 = vpop.f32.mrf.mxu0
    %v111 = vadd.f32 %v87, %v110
    %112 = vdwg.mxu0
    %v113 = vmax.f32 %v111, 0.0
    %v114 = vld [vmem:[%s5] sm:$0xff]
    %v115 = vld [vmem:[%s5 + $0x8] sm:$0xff]
    %v116 = vld [vmem:[%s5 + $0x10] sm:$0xff]
    %v117 = vld [vmem:[%s5 + $0x18] sm:$0xff]
    %v118 = vld [vmem:[%s5 + $0x20] sm:$0xff]
    %v119 = vld [vmem:[%s5 + $0x28] sm:$0xff]
    %v120 = vld [vmem:[%s5 + $0x30] sm:$0xff]
    %v121 = vld [vmem:[%s5 + $0x38] sm:$0xff]
    %v122 = vld [vmem:[%s5 + $0x40] sm:$0xff]
    %v123 = vld [vmem:[%s5 + $0x48] sm:$0xff]
    %v124 = vld [vmem:[%s5 + $0x50] sm:$0xff]
    %v125 = vld [vmem:[%s5 + $0x58] sm:$0xff]
    %v126 = vld [vmem:[%s5 + $0x60] sm:$0xff]
    %v127 = vld [vmem:[%s5 + $0x68] sm:$0xff]
    %v128 = vld [vmem:[%s5 + $0x70] sm:$0xff]
    %v129 = vld [vmem:[%s5 + $0x78] sm:$0xff]
    %v130 = vld [vmem:[%s6] sm:$0x1]
    %v132 = vperm.slane %v130, 0
    %134 = vmatpush.msra.mxu0 %v129
    %135 = vmatpush.msra.mxu0 %v128
    %136 = vmatpush.msra.mxu0 %v127
    %137 = vmatpush.msra.mxu0 %v126
    %138 = vmatpush.msra.mxu0 %v125
    %139 = vmatpush.msra.mxu0 %v124
    %140 = vmatpush.msra.mxu0 %v123
    %141 = vmatpush.msra.mxu0 %v122
    %142 = vmatpush.msra.mxu0 %v121
    %143 = vmatpush.msra.mxu0 %v120
    %144 = vmatpush.msra.mxu0 %v119
    %145 = vmatpush.msra.mxu0 %v118
    %146 = vmatpush.msra.mxu0 %v117
    %147 = vmatpush.msra.mxu0 %v116
    %148 = vmatpush.msra.mxu0 %v115
    %149 = vmatpush.msra.mxu0 %v114
    %150 = vmatmul.f32.gmra.mxu0 %v113
    %v151 = vpop.f32.mrf.mxu0
    %v152 = vadd.f32 %v132, %v151
    %153 = vdwg.mxu0
    %v154 = vmax.f32 %v152, 0.0
    %v155 = vld [vmem:[#allocation2] sm:$0xff]
    %v156 = vld [vmem:[#allocation2 + $0x8] sm:$0xff]
    %v157 = vld [vmem:[#allocation2 + $0x10] sm:$0xff]
    %v158 = vld [vmem:[#allocation2 + $0x18] sm:$0xff]
    %v159 = vld [vmem:[#allocation2 + $0x20] sm:$0xff]
    %v160 = vld [vmem:[#allocation2 + $0x28] sm:$0xff]
    %v161 = vld [vmem:[#allocation2 + $0x30] sm:$0xff]
    %v162 = vld [vmem:[#allocation2 + $0x38] sm:$0xff]
    %v163 = vld [vmem:[#allocation2 + $0x40] sm:$0xff]
    %v164 = vld [vmem:[#allocation2 + $0x48] sm:$0xff]
    %v165 = vld [vmem:[#allocation2 + $0x50] sm:$0xff]
    %v166 = vld [vmem:[#allocation2 + $0x58] sm:$0xff]
    %v167 = vld [vmem:[#allocation2 + $0x60] sm:$0xff]
    %v168 = vld [vmem:[#allocation2 + $0x68] sm:$0xff]
    %v169 = vld [vmem:[#allocation2 + $0x70] sm:$0xff]
    %v170 = vld [vmem:[#allocation2 + $0x78] sm:$0xff]
    %v171 = vld [vmem:[%s8] sm:$0x1]
    %v173 = vperm.slane %v171, 0
    %175 = vmatpush.msra.mxu0 %v170
    %176 = vmatpush.msra.mxu0 %v169
    %177 = vmatpush.msra.mxu0 %v168
    %178 = vmatpush.msra.mxu0 %v167
    %179 = vmatpush.msra.mxu0 %v166
    %180 = vmatpush.msra.mxu0 %v165
    %181 = vmatpush.msra.mxu0 %v164
    %182 = vmatpush.msra.mxu0 %v163
    %183 = vmatpush.msra.mxu0 %v162
    %184 = vmatpush.msra.mxu0 %v161
    %185 = vmatpush.msra.mxu0 %v160
    %186 = vmatpush.msra.mxu0 %v159
    %187 = vmatpush.msra.mxu0 %v158
    %188 = vmatpush.msra.mxu0 %v157
    %189 = vmatpush.msra.mxu0 %v156
    %190 = vmatpush.msra.mxu0 %v155
    %191 = vmatmul.f32.gmra.mxu0 %v154
    %v192 = vpop.f32.mrf.mxu0
    %v193 = vadd.f32 %v173, %v192
    %194 = vdwg.mxu0
    %v195 = vmax.f32 %v193, 0.0
    %v196 = vld [vmem:[%s9] sm:$0xff]
    %v197 = vld [vmem:[%s9 + $0x8] sm:$0xff]
    %v198 = vld [vmem:[%s9 + $0x10] sm:$0xff]
    %v199 = vld [vmem:[%s9 + $0x18] sm:$0xff]
    %v200 = vld [vmem:[%s9 + $0x20] sm:$0xff]
    %v201 = vld [vmem:[%s9 + $0x28] sm:$0xff]
    %v202 = vld [vmem:[%s9 + $0x30] sm:$0xff]
    %v203 = vld [vmem:[%s9 + $0x38] sm:$0xff]
    %v204 = vld [vmem:[%s9 + $0x40] sm:$0xff]
    %v205 = vld [vmem:[%s9 + $0x48] sm:$0xff]
    %v206 = vld [vmem:[%s9 + $0x50] sm:$0xff]
    %v207 = vld [vmem:[%s9 + $0x58] sm:$0xff]
    %v208 = vld [vmem:[%s9 + $0x60] sm:$0xff]
    %v209 = vld [vmem:[%s9 + $0x68] sm:$0xff]
    %v210 = vld [vmem:[%s9 + $0x70] sm:$0xff]
    %v211 = vld [vmem:[%s9 + $0x78] sm:$0xff]
    %v212 = vld [vmem:[%s10] sm:$0x1]
    %v214 = vperm.slane %v212, 0
    %216 = vmatpush.msra.mxu0 %v211
    %217 = vmatpush.msra.mxu0 %v210
    %218 = vmatpush.msra.mxu0 %v209
    %219 = vmatpush.msra.mxu0 %v208
    %220 = vmatpush.msra.mxu0 %v207
    %221 = vmatpush.msra.mxu0 %v206
    %222 = vmatpush.msra.mxu0 %v205
    %223 = vmatpush.msra.mxu0 %v204
    %224 = vmatpush.msra.mxu0 %v203
    %225 = vmatpush.msra.mxu0 %v202
    %226 = vmatpush.msra.mxu0 %v201
    %227 = vmatpush.msra.mxu0 %v200
    %228 = vmatpush.msra.mxu0 %v199
    %229 = vmatpush.msra.mxu0 %v198
    %230 = vmatpush.msra.mxu0 %v197
    %231 = vmatpush.msra.mxu0 %v196
    %232 = vmatmul.f32.gmra.mxu0 %v195
    %v233 = vpop.f32.mrf.mxu0
    %v234 = vadd.f32 %v214, %v233
    %235 = vdwg.mxu0
    %vm236 = vcmask 818176
    %237 = vst.msk [vmem:[#allocation5] sm:$0xff] %vm236, %v234
    // Predicated region
    $region50: #{pr_predictor_forward.1} parent=1 // pred_check
      _
    $region51: #{pr_predictor_forward.1} parent=1 // pred_check_branch
      %239 = sbr.rel (0) target = $region53
    $region52: #{pr_predictor_forward.1} parent=1 // pred_region
      %241 = vsyncadd [#allocation4], 0
      %s243 = sshll.u32 [#allocation5], 4
      %s244 = int_to_ptr.vmem [resolvable:$true] %s243
      %s245 = sshll.u32 %s11, 4
      %s246 = int_to_ptr.hbm [resolvable:$true] %s245
      %248 = dma.vmem_to_hbm [thread:$0]  %s244, 128, %s246, [#allocation4]
    $region53: #{pr_predictor_forward.1} parent=1 // pred_fallthru
      _
    // Predicated region
    $region54: #{pr_predictor_forward.1} parent=1 // pred_check
      _
    $region55: #{pr_predictor_forward.1} parent=1 // pred_check_branch
      %250 = sbr.rel (0) target = $region57
    $region56: #{pr_predictor_forward.1} parent=1 // pred_region
      %252 = dma.done [#allocation4], 128
    $region57: #{pr_predictor_forward.1} parent=1 // pred_fallthru
      _
    %253 = vsyncpa [#allocation3], 1
    %254 = vsyncpa [#allocation4], 1

</llo_original>
